<compile_context>
chip_gen: v7x
topology: tpu7x:2x2x1
jax: 0.10.0
libtpu: 0.0.40
codegen_flags: <defaults>
</compile_context>

<pallas_src>
import functools

import jax
import jax.numpy as jnp
from jax.experimental import pallas as pl
from jax.experimental.pallas import tpu as pltpu


def _round_up(x, m):
    return ((x + m - 1) // m) * m


def _cdiv(a, b):
    return (a + b - 1) // b


@functools.lru_cache(maxsize=None)
def _tpu_vmem_capacity_bytes() -> int:
    """Physical per-core VMEM bytes (feature-detect once; 128 MiB fallback)."""
    try:
        cap = int(pltpu.get_tpu_info().vmem_capacity_bytes)
        if cap > 0:
            return cap
    except Exception:  # feature-detect only: non-TPU backend / older JAX
        pass
    return 128 * 1024 * 1024


@functools.lru_cache(maxsize=None)
def _default_bf16_activations() -> bool:
    """bf16 bias+tanh only on chips with bf16-native VPU/EUP (v6e / v7x)."""
    try:
        kind = jax.devices()[0].device_kind.lower()
    except Exception:  # feature-detect only
        return False
    return any(tag in kind for tag in ("v6", "v7", "7x"))


def _buffered_blockspec_supported() -> bool:
    """Feature-detect pipeline_mode=pl.Buffered once at import (construction)."""
    if not hasattr(pl, "Buffered"):
        return False
    try:
        pl.BlockSpec((8, 128), lambda i: (0, 0), pipeline_mode=pl.Buffered(1))
        return True
    except TypeError:
        return False


_BUFFERED_SPEC_OK = _buffered_blockspec_supported()


def dfkm_forward_kernel(x_ref,
                        w1_ref, b1_ref,
                        w2_ref, b2_ref,
                        w3_ref, b3_ref,
                        w4_ref, b4_ref,
                        z_ref, recons_ref,
                        *, bf16_activations):
    """Fused 4-layer tanh MLP (enc1 -> enc2 -> dec1 -> dec2) for one batch tile.

    Matmuls run in the weights' dtype (bf16 on the MXU when enabled) with f32
    accumulation via preferred_element_type; bias-add + tanh run in bf16 on
    bf16-native VPU/EUP chips (v6e/v7x), f32 otherwise (v5e).
    """
    mm_dtype = w1_ref.dtype
    act_dtype = jnp.bfloat16 if bf16_activations else jnp.float32

    def layer(a, w_ref, b_ref):
        acc = jnp.dot(a.astype(mm_dtype), w_ref[...],
                      preferred_element_type=jnp.float32)
        return jnp.tanh(acc.astype(act_dtype) + b_ref[...].astype(act_dtype))

    h = layer(x_ref[...], w1_ref, b1_ref)          # enc1
    z = layer(h, w2_ref, b2_ref)                   # enc2
    r = layer(z, w3_ref, b3_ref)                   # dec1
    r = layer(r, w4_ref, b4_ref)                   # dec2

    z_ref[...] = z.astype(z_ref.dtype)
    recons_ref[...] = r.astype(recons_ref.dtype)


@functools.partial(
    jax.jit,
    static_argnames=("tile_m", "use_bf16_matmul", "bf16_activations",
                     "out_dtype", "single_buffer_weights"))
def _dfkm_forward_impl(x, params, *, tile_m, use_bf16_matmul,
                       bf16_activations, out_dtype, single_buffer_weights):
    w1, b1 = params["w1"], params["b1"]   # (d0, d1), (1, d1)
    w2, b2 = params["w2"], params["b2"]   # (d1, d2), (1, d2)
    w3, b3 = params["w3"], params["b3"]   # (d2, d1), (1, d1)
    w4, b4 = params["w4"], params["b4"]   # (d1, d0), (1, d0)

    n, d0 = x.shape
    d1 = w1.shape[1]
    d2 = w2.shape[1]

    mm_dtype = jnp.bfloat16 if use_bf16_matmul else jnp.float32
    w_item = jnp.dtype(mm_dtype).itemsize
    out_item = jnp.dtype(out_dtype).itemsize

    # Weights are small and read once per call: cast them to the matmul dtype
    # in the wrapper (halves their HBM read + resident VMEM).  x is passed
    # through untouched (no wrapper pad/cast copy); biases stay f32 and are
    # cast to the activation dtype in-kernel.
    w1 = w1.astype(mm_dtype); w2 = w2.astype(mm_dtype)
    w3 = w3.astype(mm_dtype); w4 = w4.astype(mm_dtype)
    b1 = b1.astype(jnp.float32); b2 = b2.astype(jnp.float32)
    b3 = b3.astype(jnp.float32); b4 = b4.astype(jnp.float32)

    # ----- generation-aware VMEM budget & batch tile -------------------------
    vmem_cap = _tpu_vmem_capacity_bytes()
    # Leave headroom for compiler scratch: ~54 MiB on v7x (64 MiB physical),
    # ~108 MiB on v5e/v6e (128 MiB physical).
    vmem_budget = min(int(vmem_cap * 0.85), 112 * 1024 * 1024)

    if tile_m is None:
        tile_m = 512 if vmem_cap >= 96 * 1024 * 1024 else 256

    weight_bufs = 1 if single_buffer_weights else 2
    wb_bytes = ((d0 * d1 + d1 * d2 + d2 * d1 + d1 * d0) * w_item
                + (2 * d1 + d2 + d0) * 4) * weight_bufs
    # TODO(synk): when wb_bytes approaches vmem_budget (large d0 = X.shape[0]),
    # tile enc1's K / dec2's N over a second "arbitrary" grid axis with a VMEM
    # accumulator instead of keeping w1/w4 fully resident.

    def tile_bytes(tm_):
        x_bytes = 2 * tm_ * d0 * 4                  # double-buffered f32 x tile
        o_bytes = 2 * tm_ * (d2 + d0) * out_item    # double-buffered outputs
        tmp = 4 * tm_ * max(d0, d1, d2) * 4         # in-kernel f32 intermediates
        return x_bytes + o_bytes + tmp

    tm = max(8, min(int(tile_m), _round_up(n, 8)))
    tm = _round_up(tm, 8)
    # >= 2 grid steps so dimension_semantics=("parallel",) can shard the batch
    # over both v7x TensorCores.
    while tm > 8 and _cdiv(n, tm) < 2:
        tm = _round_up(max(8, tm // 2), 8)
    # Shrink until resident weights + per-tile buffers fit the VMEM budget.
    while tm > 8 and wb_bytes + tile_bytes(tm) > vmem_budget:
        tm = _round_up(max(8, tm // 2), 8)

    grid = (_cdiv(n, tm),)

    def resident_spec(shape):
        # Full-array block whose index never changes across the grid; single
        # buffering halves resident weight VMEM when the installed JAX supports
        # pipeline_mode=pl.Buffered(1).
        if single_buffer_weights:
            return pl.BlockSpec(shape, lambda i: (0, 0),
                                pipeline_mode=pl.Buffered(1))
        return pl.BlockSpec(shape, lambda i: (0, 0))

    # Advisory cost estimate for XLA scheduling of the custom call.
    flops = 2 * n * (d0 * d1 + d1 * d2 + d2 * d1 + d1 * d0)
    transcendentals = n * (2 * d1 + d2 + d0)
    bytes_accessed = (n * d0 * 4                                           # x
                      + (d0 * d1 + d1 * d2 + d2 * d1 + d1 * d0) * w_item  # W
                      + (2 * d1 + d2 + d0) * 4                            # b
                      + n * (d2 + d0) * out_item)                         # out
    cost = pl.CostEstimate(flops=flops, transcendentals=transcendentals,
                           bytes_accessed=bytes_accessed)

    kernel = functools.partial(dfkm_forward_kernel,
                               bf16_activations=bf16_activations)

    z, recons = pl.pallas_call(
        kernel,
        out_shape=(
            jax.ShapeDtypeStruct((n, d2), out_dtype),   # z, logical shape
            jax.ShapeDtypeStruct((n, d0), out_dtype),   # recons_x, logical shape
        ),
        grid_spec=pltpu.PrefetchScalarGridSpec(
            num_scalar_prefetch=0,
            grid=grid,
            in_specs=[
                pl.BlockSpec((tm, d0), lambda i: (i, 0)),   # raw f32 x tile
                resident_spec((d0, d1)), resident_spec((1, d1)),   # enc1
                resident_spec((d1, d2)), resident_spec((1, d2)),   # enc2
                resident_spec((d2, d1)), resident_spec((1, d1)),   # dec1
                resident_spec((d1, d0)), resident_spec((1, d0)),   # dec2
            ],
            out_specs=[
                pl.BlockSpec((tm, d2), lambda i: (i, 0)),   # z
                pl.BlockSpec((tm, d0), lambda i: (i, 0)),   # recons_x
            ],
        ),
        compiler_params=pltpu.CompilerParams(
            dimension_semantics=("parallel",),   # batch axis shards over TCs
            vmem_limit_bytes=int(vmem_budget),
        ),
        cost_estimate=cost,
    )(x, w1, b1, w2, b2, w3, b3, w4, b4)

    return z, recons


def dfkm_forward(x, params, *, tile_m=None, use_bf16_matmul=True,
                 bf16_activations=None, out_dtype=jnp.float32):
    """DeepFuzzyKMeans.forward: x (N, d0) -> (z (N, d2), recons_x (N, d0))."""
    if bf16_activations is None:
        bf16_activations = _default_bf16_activations()
    kwargs = dict(tile_m=tile_m, use_bf16_matmul=bool(use_bf16_matmul),
                  bf16_activations=bool(bf16_activations), out_dtype=out_dtype)
    if _BUFFERED_SPEC_OK:
        try:
            return _dfkm_forward_impl(x, params, single_buffer_weights=True,
                                      **kwargs)
        except (TypeError, ValueError, NotImplementedError,
                pltpu.LoweringException):
            # Narrow fallback: only the Buffered(1)-lowering rejection classes.
            # Anything unrelated re-raises identically from the default-config
            # attempt below, so genuine errors (e.g. VMEM OOM -> RuntimeError)
            # are not masked, merely re-reported.
            pass
    return _dfkm_forward_impl(x, params, single_buffer_weights=False, **kwargs)


def init_params(key, layers):
    """Deterministic torch.nn.Linear-style init, stored transposed as (in, out)."""
    d0, d1, d2 = layers
    dims = [(d0, d1), (d1, d2), (d2, d1), (d1, d0)]  # enc1, enc2, dec1, dec2
    params = {}
    keys = jax.random.split(key, 2 * len(dims))
    for idx, (din, dout) in enumerate(dims):
        bound = 1.0 / jnp.sqrt(jnp.float32(din))
        w = jax.random.uniform(keys[2 * idx], (din, dout), jnp.float32,
                               minval=-bound, maxval=bound)
        b = jax.random.uniform(keys[2 * idx + 1], (1, dout), jnp.float32,
                               minval=-bound, maxval=bound)
        params[f"w{idx + 1}"] = w
        params[f"b{idx + 1}"] = b
    return params


def reference_forward(x, params, mm_dtype=jnp.float32, act_dtype=jnp.float32):
    """Plain-JAX reference of DeepFuzzyKMeans.forward (matmuls in mm_dtype,
    bias-add + tanh in act_dtype, f32 accumulation)."""
    def layer(a, w, b):
        acc = jnp.dot(a.astype(mm_dtype), w.astype(mm_dtype),
                      preferred_element_type=jnp.float32)
        return jnp.tanh(acc.astype(act_dtype) + b.astype(act_dtype))
    h = layer(x, params["w1"], params["b1"])
    z = layer(h, params["w2"], params["b2"])
    r = layer(z, params["w3"], params["b3"])
    r = layer(r, params["w4"], params["b4"])
    return z, r


if __name__ == "__main__":
    # Small shapes consistent with the module (layers = [d0, d1, d2]; module
    # default is [X.shape[0], 500, 300], scaled down).  d0/d2 are deliberately
    # not multiples of 128 and the batch is not a multiple of the tile, to
    # exercise the unpadded / ragged-last-tile path.
    layers = (64, 128, 32)   # d0, d1, d2
    batch = 20               # rows of x (i.e. columns of X in the torch code)

    key = jax.random.PRNGKey(0)
    kx, kp = jax.random.split(key)
    x = jax.random.normal(kx, (batch, layers[0]), jnp.float32)
    params = init_params(kp, layers)

    z, recons_x = dfkm_forward(x, params)
    jax.block_until_ready((z, recons_x))

    assert z.shape == (batch, layers[2])
    assert recons_x.shape == (batch, layers[0])

    # Matching-precision reference (same matmul / activation dtypes as kernel).
    act_dt = jnp.bfloat16 if _default_bf16_activations() else jnp.float32
    z_ref, r_ref = reference_forward(x, params, mm_dtype=jnp.bfloat16,
                                     act_dtype=act_dt)
    assert jnp.allclose(z, z_ref, atol=2e-2, rtol=2e-2)
    assert jnp.allclose(recons_x, r_ref, atol=2e-2, rtol=2e-2)

    # Full-f32 reference -> loose tolerance (bf16 MXU / activation path).
    z32, r32 = reference_forward(x, params)
    assert jnp.allclose(z, z32, atol=8e-2, rtol=8e-2)
    assert jnp.allclose(recons_x, r32, atol=8e-2, rtol=8e-2)

    print("KERNEL_OK")
</pallas_src>

<mosaic_0001>
module attributes {stable_mosaic.version = 11 : i64} {
  func.func @dfkm_forward_kernel(%arg0: i32, %arg1: memref<16x64xf32, #tpu.memory_space<vmem>>, %arg2: memref<64x128xbf16, #tpu.memory_space<vmem>>, %arg3: memref<1x128xf32, #tpu.memory_space<vmem>>, %arg4: memref<128x32xbf16, #tpu.memory_space<vmem>>, %arg5: memref<1x32xf32, #tpu.memory_space<vmem>>, %arg6: memref<32x128xbf16, #tpu.memory_space<vmem>>, %arg7: memref<1x128xf32, #tpu.memory_space<vmem>>, %arg8: memref<128x64xbf16, #tpu.memory_space<vmem>>, %arg9: memref<1x64xf32, #tpu.memory_space<vmem>>, %arg10: memref<16x32xf32, #tpu.memory_space<vmem>>, %arg11: memref<16x64xf32, #tpu.memory_space<vmem>>) attributes {dimension_semantics = [#tpu.dimension_semantics<parallel>], iteration_bounds = array<i64: 2>, scalar_prefetch = 0 : i64, scratch_operands = 0 : i64, tpu.core_type = #tpu.core_type<tc>, window_params = [{transform_indices = @transform_0, window_bounds = array<i64: 16, 64>}, {pipeline_mode = #tpu.pipeline_mode<synchronous>, transform_indices = @transform_1, window_bounds = array<i64: 64, 128>}, {pipeline_mode = #tpu.pipeline_mode<synchronous>, transform_indices = @transform_2, window_bounds = array<i64: 1, 128>}, {pipeline_mode = #tpu.pipeline_mode<synchronous>, transform_indices = @transform_3, window_bounds = array<i64: 128, 32>}, {pipeline_mode = #tpu.pipeline_mode<synchronous>, transform_indices = @transform_4, window_bounds = array<i64: 1, 32>}, {pipeline_mode = #tpu.pipeline_mode<synchronous>, transform_indices = @transform_5, window_bounds = array<i64: 32, 128>}, {pipeline_mode = #tpu.pipeline_mode<synchronous>, transform_indices = @transform_6, window_bounds = array<i64: 1, 128>}, {pipeline_mode = #tpu.pipeline_mode<synchronous>, transform_indices = @transform_7, window_bounds = array<i64: 128, 64>}, {pipeline_mode = #tpu.pipeline_mode<synchronous>, transform_indices = @transform_8, window_bounds = array<i64: 1, 64>}, {transform_indices = @transform_9, window_bounds = array<i64: 16, 32>}, {transform_indices = @transform_10, window_bounds = array<i64: 16, 64>}]} {
    %c0 = arith.constant 0 : index
    %c0_0 = arith.constant 0 : index
    %0 = vector.load %arg1[%c0, %c0_0] : memref<16x64xf32, #tpu.memory_space<vmem>>, vector<16x64xf32>
    %1 = arith.truncf %0 : vector<16x64xf32> to vector<16x64xbf16>
    %c0_1 = arith.constant 0 : index
    %c0_2 = arith.constant 0 : index
    %2 = vector.load %arg2[%c0_1, %c0_2] : memref<64x128xbf16, #tpu.memory_space<vmem>>, vector<64x128xbf16>
    %cst = arith.constant dense<0.000000e+00> : vector<16x128xf32>
    %3 = tpu.matmul %1, %2, %cst {dimension_numbers = #tpu.dot_dimension_numbers<[1], [0], [0], [1], [0, 0, 1, 1], [], []>} : vector<16x64xbf16>, vector<64x128xbf16>, vector<16x128xf32> -> vector<16x128xf32>
    %c0_3 = arith.constant 0 : index
    %c0_4 = arith.constant 0 : index
    %4 = vector.load %arg3[%c0_3, %c0_4] : memref<1x128xf32, #tpu.memory_space<vmem>>, vector<1x128xf32>
    %5 = vector.broadcast %4 : vector<1x128xf32> to vector<16x128xf32>
    %6 = arith.addf %3, %5 : vector<16x128xf32>
    %7 = math.tanh %6 : vector<16x128xf32>
    %8 = arith.truncf %7 : vector<16x128xf32> to vector<16x128xbf16>
    %c0_5 = arith.constant 0 : index
    %c0_6 = arith.constant 0 : index
    %9 = vector.load %arg4[%c0_5, %c0_6] : memref<128x32xbf16, #tpu.memory_space<vmem>>, vector<128x32xbf16>
    %cst_7 = arith.constant dense<0.000000e+00> : vector<16x32xf32>
    %10 = tpu.matmul %8, %9, %cst_7 {dimension_numbers = #tpu.dot_dimension_numbers<[1], [0], [0], [1], [0, 0, 1, 1], [], []>} : vector<16x128xbf16>, vector<128x32xbf16>, vector<16x32xf32> -> vector<16x32xf32>
    %c0_8 = arith.constant 0 : index
    %c0_9 = arith.constant 0 : index
    %11 = vector.load %arg5[%c0_8, %c0_9] : memref<1x32xf32, #tpu.memory_space<vmem>>, vector<1x32xf32>
    %12 = vector.broadcast %11 : vector<1x32xf32> to vector<16x32xf32>
    %13 = arith.addf %10, %12 : vector<16x32xf32>
    %14 = math.tanh %13 : vector<16x32xf32>
    %15 = arith.truncf %14 : vector<16x32xf32> to vector<16x32xbf16>
    %c0_10 = arith.constant 0 : index
    %c0_11 = arith.constant 0 : index
    %16 = vector.load %arg6[%c0_10, %c0_11] : memref<32x128xbf16, #tpu.memory_space<vmem>>, vector<32x128xbf16>
    %cst_12 = arith.constant dense<0.000000e+00> : vector<16x128xf32>
    %17 = tpu.matmul %15, %16, %cst_12 {dimension_numbers = #tpu.dot_dimension_numbers<[1], [0], [0], [1], [0, 0, 1, 1], [], []>} : vector<16x32xbf16>, vector<32x128xbf16>, vector<16x128xf32> -> vector<16x128xf32>
    %c0_13 = arith.constant 0 : index
    %c0_14 = arith.constant 0 : index
    %18 = vector.load %arg7[%c0_13, %c0_14] : memref<1x128xf32, #tpu.memory_space<vmem>>, vector<1x128xf32>
    %19 = vector.broadcast %18 : vector<1x128xf32> to vector<16x128xf32>
    %20 = arith.addf %17, %19 : vector<16x128xf32>
    %21 = math.tanh %20 : vector<16x128xf32>
    %22 = arith.truncf %21 : vector<16x128xf32> to vector<16x128xbf16>
    %c0_15 = arith.constant 0 : index
    %c0_16 = arith.constant 0 : index
    %23 = vector.load %arg8[%c0_15, %c0_16] : memref<128x64xbf16, #tpu.memory_space<vmem>>, vector<128x64xbf16>
    %cst_17 = arith.constant dense<0.000000e+00> : vector<16x64xf32>
    %24 = tpu.matmul %22, %23, %cst_17 {dimension_numbers = #tpu.dot_dimension_numbers<[1], [0], [0], [1], [0, 0, 1, 1], [], []>} : vector<16x128xbf16>, vector<128x64xbf16>, vector<16x64xf32> -> vector<16x64xf32>
    %c0_18 = arith.constant 0 : index
    %c0_19 = arith.constant 0 : index
    %25 = vector.load %arg9[%c0_18, %c0_19] : memref<1x64xf32, #tpu.memory_space<vmem>>, vector<1x64xf32>
    %26 = vector.broadcast %25 : vector<1x64xf32> to vector<16x64xf32>
    %27 = arith.addf %24, %26 : vector<16x64xf32>
    %28 = math.tanh %27 : vector<16x64xf32>
    %c0_20 = arith.constant 0 : index
    %c0_21 = arith.constant 0 : index
    %29 = vector.load %arg10[%c0_20, %c0_21] : memref<16x32xf32, #tpu.memory_space<vmem>>, vector<16x32xf32>
    tpu.vector_store %arg10[%c0_20, %c0_21], %14 {strides = array<i32>} : memref<16x32xf32, #tpu.memory_space<vmem>>, vector<16x32xf32>,
    %c0_22 = arith.constant 0 : index
    %c0_23 = arith.constant 0 : index
    %30 = vector.load %arg11[%c0_22, %c0_23] : memref<16x64xf32, #tpu.memory_space<vmem>>, vector<16x64xf32>
    tpu.vector_store %arg11[%c0_22, %c0_23], %28 {strides = array<i32>} : memref<16x64xf32, #tpu.memory_space<vmem>>, vector<16x64xf32>,
    return
  }
  func.func @transform_0(%arg0: i32) -> (i32, i32) {
    %c0_i32 = arith.constant 0 : i32
    %c0_i32_0 = arith.constant 0 : i32
    return %arg0, %c0_i32 : i32, i32
  }
  func.func @transform_1(%arg0: i32) -> (i32, i32) {
    %c0_i32 = arith.constant 0 : i32
    %c0_i32_0 = arith.constant 0 : i32
    %c0_i32_1 = arith.constant 0 : i32
    return %c0_i32, %c0_i32_0 : i32, i32
  }
  func.func @transform_2(%arg0: i32) -> (i32, i32) {
    %c0_i32 = arith.constant 0 : i32
    %c0_i32_0 = arith.constant 0 : i32
    %c0_i32_1 = arith.constant 0 : i32
    return %c0_i32, %c0_i32_0 : i32, i32
  }
  func.func @transform_3(%arg0: i32) -> (i32, i32) {
    %c0_i32 = arith.constant 0 : i32
    %c0_i32_0 = arith.constant 0 : i32
    %c0_i32_1 = arith.constant 0 : i32
    return %c0_i32, %c0_i32_0 : i32, i32
  }
  func.func @transform_4(%arg0: i32) -> (i32, i32) {
    %c0_i32 = arith.constant 0 : i32
    %c0_i32_0 = arith.constant 0 : i32
    %c0_i32_1 = arith.constant 0 : i32
    return %c0_i32, %c0_i32_0 : i32, i32
  }
  func.func @transform_5(%arg0: i32) -> (i32, i32) {
    %c0_i32 = arith.constant 0 : i32
    %c0_i32_0 = arith.constant 0 : i32
    %c0_i32_1 = arith.constant 0 : i32
    return %c0_i32, %c0_i32_0 : i32, i32
  }
  func.func @transform_6(%arg0: i32) -> (i32, i32) {
    %c0_i32 = arith.constant 0 : i32
    %c0_i32_0 = arith.constant 0 : i32
    %c0_i32_1 = arith.constant 0 : i32
    return %c0_i32, %c0_i32_0 : i32, i32
  }
  func.func @transform_7(%arg0: i32) -> (i32, i32) {
    %c0_i32 = arith.constant 0 : i32
    %c0_i32_0 = arith.constant 0 : i32
    %c0_i32_1 = arith.constant 0 : i32
    return %c0_i32, %c0_i32_0 : i32, i32
  }
  func.func @transform_8(%arg0: i32) -> (i32, i32) {
    %c0_i32 = arith.constant 0 : i32
    %c0_i32_0 = arith.constant 0 : i32
    %c0_i32_1 = arith.constant 0 : i32
    return %c0_i32, %c0_i32_0 : i32, i32
  }
  func.func @transform_9(%arg0: i32) -> (i32, i32) {
    %c0_i32 = arith.constant 0 : i32
    %c0_i32_0 = arith.constant 0 : i32
    return %arg0, %c0_i32 : i32, i32
  }
  func.func @transform_10(%arg0: i32) -> (i32, i32) {
    %c0_i32 = arith.constant 0 : i32
    %c0_i32_0 = arith.constant 0 : i32
    return %arg0, %c0_i32 : i32, i32
  }
}

</mosaic_0001>

<llo_original>
// kernel: _dfkm_forward_impl.1
$region0: #{_dfkm_forward_impl.1}
  #allocation0 [shape = 'u32[]', space=smem, size = 0x4, offset = 0x4, fixed_abs, tag = 'smem constant byte address 0x4 - core index']
  #allocation1 [shape = 'u32[144,128]{1,0:T(1,128)}', space=vmem, size = 0x12000, scoped, tag = 'internal scratch']
  %s0 = inlined_call_operand.hbm [shape: f32[20,64], index: 0, kind: input, shape index: {}]
  %s1 = inlined_call_operand.hbm [shape: bf16[64,128], index: 1, kind: input, shape index: {}]
  %s2 = inlined_call_operand.hbm [shape: f32[1,128], index: 2, kind: input, shape index: {}]
  %s3 = inlined_call_operand.hbm [shape: bf16[128,32], index: 3, kind: input, shape index: {}]
  %s4 = inlined_call_operand.hbm [shape: f32[1,32], index: 4, kind: input, shape index: {}]
  %s5 = inlined_call_operand.hbm [shape: bf16[32,128], index: 5, kind: input, shape index: {}]
  %s6 = inlined_call_operand.hbm [shape: f32[1,128], index: 6, kind: input, shape index: {}]
  %s7 = inlined_call_operand.hbm [shape: bf16[128,64], index: 7, kind: input, shape index: {}]
  %s8 = inlined_call_operand.hbm [shape: f32[1,64], index: 8, kind: input, shape index: {}]
  %s9 = inlined_call_operand.hbm [shape: f32[20,32], index: 9, kind: output, shape index: {0}]
  %s10 = inlined_call_operand.hbm [shape: f32[20,64], index: 10, kind: output, shape index: {1}]
  %11 = xla_tuple %s9, %s10
  %s12 = sld [smem:[#allocation0]]
  $region113: #{_dfkm_forward_impl.1} parent=0
    _
  %s14 = ssub.s32 1, %s12
  %s15 = scalar_select 0, %s14, %s12
  $region1: #{_dfkm_forward_impl.1} parent=0
    #allocation2 [shape = 'u8[16384]{0}', space=vmem, size = 0x4000, scoped, tag = 'input window, operand 0']
    #allocation3 [shape = 's32[2]{0}', space=sflag, size = 0x8, scoped, tag = 'scoped memory for _dfkm_forward_impl.1']
    #allocation4 [shape = 's32[2]{0}', space=sflag, size = 0x8, scoped, tag = 'scoped memory for _dfkm_forward_impl.1']
    #allocation5 [shape = 'u8[16384]{0}', space=vmem, size = 0x4000, scoped, tag = 'input window, operand 1, single buffered']
    #allocation6 [shape = 's32[1]{0}', space=sflag, size = 0x4, scoped, tag = 'scoped memory for _dfkm_forward_impl.1']
    #allocation7 [shape = 'u8[512]{0}', space=vmem, size = 0x400, scoped, tag = 'input window, operand 2, single buffered']
    #allocation8 [shape = 'u8[32768]{0}', space=vmem, size = 0x8000, scoped, tag = 'input window, operand 3, single buffered']
    #allocation9 [shape = 's32[1]{0}', space=sflag, size = 0x4, scoped, tag = 'scoped memory for _dfkm_forward_impl.1']
    #allocation10 [shape = 'u8[512]{0}', space=vmem, size = 0x400, scoped, tag = 'input window, operand 4, single buffered']
    #allocation11 [shape = 'u8[8192]{0}', space=vmem, size = 0x2000, scoped, tag = 'input window, operand 5, single buffered']
    #allocation12 [shape = 's32[1]{0}', space=sflag, size = 0x4, scoped, tag = 'scoped memory for _dfkm_forward_impl.1']
    #allocation13 [shape = 'u8[512]{0}', space=vmem, size = 0x400, scoped, tag = 'input window, operand 6, single buffered']
    #allocation14 [shape = 'u8[32768]{0}', space=vmem, size = 0x8000, scoped, tag = 'input window, operand 7, single buffered']
    #allocation15 [shape = 's32[1]{0}', space=sflag, size = 0x4, scoped, tag = 'scoped memory for _dfkm_forward_impl.1']
    #allocation16 [shape = 'u8[512]{0}', space=vmem, size = 0x400, scoped, tag = 'input window, operand 8, single buffered']
    #allocation17 [shape = 'u8[16384]{0}', space=vmem, size = 0x4000, scoped, tag = 'output window, operand 0']
    #allocation18 [shape = 'u8[16384]{0}', space=vmem, size = 0x4000, scoped, tag = 'output window, operand 1']
    #allocation19 [shape = 's32[2]{0}', space=sflag, size = 0x8, scoped, tag = 'scoped memory for _dfkm_forward_impl.1']
    %16 = vsyncpa [#allocation3], 0
    %s17 = scalar_lea.sflag [#allocation3], 1
    %18 = vsyncpa %s17, 0
    %19 = vsyncpa [#allocation6], 0
    %20 = vsyncpa [#allocation9], 0
    %21 = vsyncpa [#allocation12], 0
    %22 = vsyncpa [#allocation15], 0
    %23 = vsyncpa [#allocation4], 0
    %s24 = scalar_lea.sflag [#allocation4], 1
    %25 = vsyncpa %s24, 0
    %26 = vsyncpa [#allocation19], 0
    %s27 = scalar_lea.sflag [#allocation19], 1
    %28 = vsyncpa %s27, 0
    loop: start=0, step=1, limit=4
    $region2: #{_dfkm_forward_impl.1} parent=1 // loop_pre_header
      _
    $region3: #{_dfkm_forward_impl.1} parent=1 // loop_header
      %s30 = sphi 0, %s34
      %p31 = scmp.ge.s32.totalorder %s30, 4
      %s40 = sphi 0, %s42
      %s43 = sphi 0, %s40
      %s44 = sphi 0, %s43
      %s60 = sphi 0, %s44
      %s64 = sphi 0, %s64
      %s66 = sphi 0, %s64
      %s67 = sphi 0, %s66
      %s81 = sphi 0, %s67
      %s85 = sphi 0, %s85
      %s87 = sphi 0, %s85
      %s88 = sphi 0, %s87
      %s102 = sphi 0, %s88
      %s106 = sphi 0, %s106
      %s108 = sphi 0, %s106
      %s109 = sphi 0, %s108
      %s123 = sphi 0, %s109
      %s127 = sphi 0, %s127
      %s129 = sphi 0, %s127
      %s130 = sphi 0, %s129
      %s144 = sphi 0, %s130
      %s148 = sphi 0, %s148
      %s150 = sphi 0, %s148
      %s151 = sphi 0, %s150
      %s165 = sphi 0, %s151
      %s169 = sphi 0, %s169
      %s171 = sphi 0, %s169
      %s172 = sphi 0, %s171
      %s186 = sphi 0, %s172
      %s190 = sphi 0, %s190
      %s192 = sphi 0, %s190
      %s193 = sphi 0, %s192
      %s207 = sphi 0, %s193
      %s211 = sphi 0, %s211
      %s213 = sphi 0, %s211
      %s214 = sphi 0, %s213
      %s228 = sphi 0, %s214
      %s234 = sphi 0, %s236
      %s237 = sphi 0, %s234
      %s238 = sphi 0, %s237
      %s254 = sphi 0, %s238
      %s260 = sphi 0, %s262
      %s263 = sphi 0, %s260
      %s264 = sphi 0, %s263
      %s280 = sphi 0, %s264
    $region4: #{_dfkm_forward_impl.1} parent=1 // loop_header_branch
      %33 = sbr.rel (%p31) target = $region8
    $region5: #{_dfkm_forward_impl.1} parent=1 // loop_body
      %s35 = ssub.s32 %s30, 1
      %s36 = ssub.s32 %s30, 2
      %s37 = sadd.s32 %s30, 1
      %s38 = ssub.s32 %s30, %s37
      %p39 = scmp.eq.s32.totalorder %s38, 0
      %s41 = sadd.s32 %s40, 1
      %s42 = scalar_select %p39, %s40, %s41
      %p45 = pneg %p39
      %p46 = scmp.eq.s32.totalorder %s30, 1
      %p47 = por %p45, %p46
      %p48 = scmp.ne.s32.totalorder %s40, %s43
      %p49 = scmp.eq.s32.totalorder %s30, 0
      %p50 = por %p48, %p49
      %p51 = scmp.ne.s32.totalorder %s40, %s43
      %p52 = scmp.eq.s32.totalorder %s35, 1
      %p53 = por %p51, %p52
      %p54 = scmp.ne.s32.totalorder %s43, %s44
      %p55 = scmp.eq.s32.totalorder %s35, 0
      %p56 = por %p54, %p55
      %p57 = scmp.ne.s32.totalorder %s43, %s44
      %p58 = scmp.eq.s32.totalorder %s36, 1
      %p59 = por %p57, %p58
      %p61 = scmp.ne.s32.totalorder %s44, %s60
      %p62 = scmp.eq.s32.totalorder %s36, 0
      %p63 = por %p61, %p62
      %s65 = sadd.s32 %s64, 1
      %p68 = scmp.eq.s32.totalorder %s30, 1
      %p69 = scmp.ne.s32.totalorder %s64, %s66
      %p70 = scmp.eq.s32.totalorder %s30, 0
      %p71 = por %p69, %p70
      %p72 = scmp.ne.s32.totalorder %s64, %s66
      %p73 = scmp.eq.s32.totalorder %s35, 1
      %p74 = por %p72, %p73
      %p75 = scmp.ne.s32.totalorder %s66, %s67
      %p76 = scmp.eq.s32.totalorder %s35, 0
      %p77 = por %p75, %p76
      %p78 = scmp.ne.s32.totalorder %s66, %s67
      %p79 = scmp.eq.s32.totalorder %s36, 1
      %p80 = por %p78, %p79
      %p82 = scmp.ne.s32.totalorder %s67, %s81
      %p83 = scmp.eq.s32.totalorder %s36, 0
      %p84 = por %p82, %p83
      %s86 = sadd.s32 %s85, 1
      %p89 = scmp.eq.s32.totalorder %s30, 1
      %p90 = scmp.ne.s32.totalorder %s85, %s87
      %p91 = scmp.eq.s32.totalorder %s30, 0
      %p92 = por %p90, %p91
      %p93 = scmp.ne.s32.totalorder %s85, %s87
      %p94 = scmp.eq.s32.totalorder %s35, 1
      %p95 = por %p93, %p94
      %p96 = scmp.ne.s32.totalorder %s87, %s88
      %p97 = scmp.eq.s32.totalorder %s35, 0
      %p98 = por %p96, %p97
      %p99 = scmp.ne.s32.totalorder %s87, %s88
      %p100 = scmp.eq.s32.totalorder %s36, 1
      %p101 = por %p99, %p100
      %p103 = scmp.ne.s32.totalorder %s88, %s102
      %p104 = scmp.eq.s32.totalorder %s36, 0
      %p105 = por %p103, %p104
      %s107 = sadd.s32 %s106, 1
      %p110 = scmp.eq.s32.totalorder %s30, 1
      %p111 = scmp.ne.s32.totalorder %s106, %s108
      %p112 = scmp.eq.s32.totalorder %s30, 0
      %p113 = por %p111, %p112
      %p114 = scmp.ne.s32.totalorder %s106, %s108
      %p115 = scmp.eq.s32.totalorder %s35, 1
      %p116 = por %p114, %p115
      %p117 = scmp.ne.s32.totalorder %s108, %s109
      %p118 = scmp.eq.s32.totalorder %s35, 0
      %p119 = por %p117, %p118
      %p120 = scmp.ne.s32.totalorder %s108, %s109
      %p121 = scmp.eq.s32.totalorder %s36, 1
      %p122 = por %p120, %p121
      %p124 = scmp.ne.s32.totalorder %s109, %s123
      %p125 = scmp.eq.s32.totalorder %s36, 0
      %p126 = por %p124, %p125
      %s128 = sadd.s32 %s127, 1
      %p131 = scmp.eq.s32.totalorder %s30, 1
      %p132 = scmp.ne.s32.totalorder %s127, %s129
      %p133 = scmp.eq.s32.totalorder %s30, 0
      %p134 = por %p132, %p133
      %p135 = scmp.ne.s32.totalorder %s127, %s129
      %p136 = scmp.eq.s32.totalorder %s35, 1
      %p137 = por %p135, %p136
      %p138 = scmp.ne.s32.totalorder %s129, %s130
      %p139 = scmp.eq.s32.totalorder %s35, 0
      %p140 = por %p138, %p139
      %p141 = scmp.ne.s32.totalorder %s129, %s130
      %p142 = scmp.eq.s32.totalorder %s36, 1
      %p143 = por %p141, %p142
      %p145 = scmp.ne.s32.totalorder %s130, %s144
      %p146 = scmp.eq.s32.totalorder %s36, 0
      %p147 = por %p145, %p146
      %s149 = sadd.s32 %s148, 1
      %p152 = scmp.eq.s32.totalorder %s30, 1
      %p153 = scmp.ne.s32.totalorder %s148, %s150
      %p154 = scmp.eq.s32.totalorder %s30, 0
      %p155 = por %p153, %p154
      %p156 = scmp.ne.s32.totalorder %s148, %s150
      %p157 = scmp.eq.s32.totalorder %s35, 1
      %p158 = por %p156, %p157
      %p159 = scmp.ne.s32.totalorder %s150, %s151
      %p160 = scmp.eq.s32.totalorder %s35, 0
      %p161 = por %p159, %p160
      %p162 = scmp.ne.s32.totalorder %s150, %s151
      %p163 = scmp.eq.s32.totalorder %s36, 1
      %p164 = por %p162, %p163
      %p166 = scmp.ne.s32.totalorder %s151, %s165
      %p167 = scmp.eq.s32.totalorder %s36, 0
      %p168 = por %p166, %p167
      %s170 = sadd.s32 %s169, 1
      %p173 = scmp.eq.s32.totalorder %s30, 1
      %p174 = scmp.ne.s32.totalorder %s169, %s171
      %p175 = scmp.eq.s32.totalorder %s30, 0
      %p176 = por %p174, %p175
      %p177 = scmp.ne.s32.totalorder %s169, %s171
      %p178 = scmp.eq.s32.totalorder %s35, 1
      %p179 = por %p177, %p178
      %p180 = scmp.ne.s32.totalorder %s171, %s172
      %p181 = scmp.eq.s32.totalorder %s35, 0
      %p182 = por %p180, %p181
      %p183 = scmp.ne.s32.totalorder %s171, %s172
      %p184 = scmp.eq.s32.totalorder %s36, 1
      %p185 = por %p183, %p184
      %p187 = scmp.ne.s32.totalorder %s172, %s186
      %p188 = scmp.eq.s32.totalorder %s36, 0
      %p189 = por %p187, %p188
      %s191 = sadd.s32 %s190, 1
      %p194 = scmp.eq.s32.totalorder %s30, 1
      %p195 = scmp.ne.s32.totalorder %s190, %s192
      %p196 = scmp.eq.s32.totalorder %s30, 0
      %p197 = por %p195, %p196
      %p198 = scmp.ne.s32.totalorder %s190, %s192
      %p199 = scmp.eq.s32.totalorder %s35, 1
      %p200 = por %p198, %p199
      %p201 = scmp.ne.s32.totalorder %s192, %s193
      %p202 = scmp.eq.s32.totalorder %s35, 0
      %p203 = por %p201, %p202
      %p204 = scmp.ne.s32.totalorder %s192, %s193
      %p205 = scmp.eq.s32.totalorder %s36, 1
      %p206 = por %p204, %p205
      %p208 = scmp.ne.s32.totalorder %s193, %s207
      %p209 = scmp.eq.s32.totalorder %s36, 0
      %p210 = por %p208, %p209
      %s212 = sadd.s32 %s211, 1
      %p215 = scmp.eq.s32.totalorder %s30, 1
      %p216 = scmp.ne.s32.totalorder %s211, %s213
      %p217 = scmp.eq.s32.totalorder %s30, 0
      %p218 = por %p216, %p217
      %p219 = scmp.ne.s32.totalorder %s211, %s213
      %p220 = scmp.eq.s32.totalorder %s35, 1
      %p221 = por %p219, %p220
      %p222 = scmp.ne.s32.totalorder %s213, %s214
      %p223 = scmp.eq.s32.totalorder %s35, 0
      %p224 = por %p222, %p223
      %p225 = scmp.ne.s32.totalorder %s213, %s214
      %p226 = scmp.eq.s32.totalorder %s36, 1
      %p227 = por %p225, %p226
      %p229 = scmp.ne.s32.totalorder %s214, %s228
      %p230 = scmp.eq.s32.totalorder %s36, 0
      %p231 = por %p229, %p230
      %s232 = ssub.s32 %s30, %s37
      %p233 = scmp.eq.s32.totalorder %s232, 0
      %s235 = sadd.s32 %s234, 1
      %s236 = scalar_select %p233, %s234, %s235
      %p239 = pneg %p233
      %p240 = scmp.eq.s32.totalorder %s30, 1
      %p241 = por %p239, %p240
      %p242 = scmp.ne.s32.totalorder %s234, %s237
      %p243 = scmp.eq.s32.totalorder %s30, 0
      %p244 = por %p242, %p243
      %p245 = scmp.ne.s32.totalorder %s234, %s237
      %p246 = scmp.eq.s32.totalorder %s35, 1
      %p247 = por %p245, %p246
      %p248 = scmp.ne.s32.totalorder %s237, %s238
      %p249 = scmp.eq.s32.totalorder %s35, 0
      %p250 = por %p248, %p249
      %p251 = scmp.ne.s32.totalorder %s237, %s238
      %p252 = scmp.eq.s32.totalorder %s36, 1
      %p253 = por %p251, %p252
      %p255 = scmp.ne.s32.totalorder %s238, %s254
      %p256 = scmp.eq.s32.totalorder %s36, 0
      %p257 = por %p255, %p256
      %s258 = ssub.s32 %s30, %s37
      %p259 = scmp.eq.s32.totalorder %s258, 0
      %s261 = sadd.s32 %s260, 1
      %s262 = scalar_select %p259, %s260, %s261
      %p265 = pneg %p259
      %p266 = scmp.eq.s32.totalorder %s30, 1
      %p267 = por %p265, %p266
      %p268 = scmp.ne.s32.totalorder %s260, %s263
      %p269 = scmp.eq.s32.totalorder %s30, 0
      %p270 = por %p268, %p269
      %p271 = scmp.ne.s32.totalorder %s260, %s263
      %p272 = scmp.eq.s32.totalorder %s35, 1
      %p273 = por %p271, %p272
      %p274 = scmp.ne.s32.totalorder %s263, %s264
      %p275 = scmp.eq.s32.totalorder %s35, 0
      %p276 = por %p274, %p275
      %p277 = scmp.ne.s32.totalorder %s263, %s264
      %p278 = scmp.eq.s32.totalorder %s36, 1
      %p279 = por %p277, %p278
      %p281 = scmp.ne.s32.totalorder %s264, %s280
      %p282 = scmp.eq.s32.totalorder %s36, 0
      %p283 = por %p281, %p282
      %p284 = scmp.le.s32.totalorder 1, %s30
      %p285 = scmp.lt.s32.totalorder %s30, 3
      %p286 = pnand %p284, %p285
      %p287 = pneg %p286
      // Predicated region
      $region9: #{_dfkm_forward_impl.1} parent=5 // pred_check
        _
      $region10: #{_dfkm_forward_impl.1} parent=5 // pred_check_branch
        %289 = sbr.rel (%p286) target = $region12
      $region11: #{_dfkm_forward_impl.1} parent=5 // pred_region
        %s290 = ssub.s32 %s30, 1
        // Predicated region
        $region13: #{_dfkm_forward_impl.1} parent=11 // pred_check
          %p291 = pneg %p77
        $region14: #{_dfkm_forward_impl.1} parent=11 // pred_check_branch
          %293 = sbr.rel (%p291) target = $region16
        $region15: #{_dfkm_forward_impl.1} parent=11 // pred_region
          %s295 = ssub.s32 512, 512
          %296 = vsyncadd [#allocation6], %s295
          %s297 = sshll.u32 [#allocation5], 4
          %s298 = int_to_ptr.vmem [resolvable:$true] %s297
          %303 = dma.hbm_to_vmem [thread:$0]  %s1, 512, %s298, [#allocation6], 64, 64, 4
        $region16: #{_dfkm_forward_impl.1} parent=11 // pred_fallthru
          _
        // Predicated region
        $region17: #{_dfkm_forward_impl.1} parent=11 // pred_check
          %p304 = pneg %p98
        $region18: #{_dfkm_forward_impl.1} parent=11 // pred_check_branch
          %306 = sbr.rel (%p304) target = $region20
        $region19: #{_dfkm_forward_impl.1} parent=11 // pred_region
          %s308 = ssub.s32 16, 16
          %309 = vsyncadd [#allocation6], %s308
          %s311 = sshll.u32 [#allocation7], 4
          %s312 = int_to_ptr.vmem [resolvable:$true] %s311
          %314 = dma.hbm_to_vmem [thread:$0]  %s2, 16, %s312, [#allocation6]
        $region20: #{_dfkm_forward_impl.1} parent=11 // pred_fallthru
          _
        // Predicated region
        $region21: #{_dfkm_forward_impl.1} parent=11 // pred_check
          %p315 = pneg %p119
        $region22: #{_dfkm_forward_impl.1} parent=11 // pred_check_branch
          %317 = sbr.rel (%p315) target = $region24
        $region23: #{_dfkm_forward_impl.1} parent=11 // pred_region
          %s319 = ssub.s32 1024, 1024
          %320 = vsyncadd [#allocation9], %s319
          %s321 = sshll.u32 [#allocation8], 4
          %s322 = int_to_ptr.vmem [resolvable:$true] %s321
          %327 = dma.hbm_to_vmem [thread:$0]  %s3, 1024, %s322, [#allocation9], 64, 64, 4
        $region24: #{_dfkm_forward_impl.1} parent=11 // pred_fallthru
          _
        // Predicated region
        $region25: #{_dfkm_forward_impl.1} parent=11 // pred_check
          %p328 = pneg %p140
        $region26: #{_dfkm_forward_impl.1} parent=11 // pred_check_branch
          %330 = sbr.rel (%p328) target = $region28
        $region27: #{_dfkm_forward_impl.1} parent=11 // pred_region
          %s332 = ssub.s32 16, 16
          %333 = vsyncadd [#allocation9], %s332
          %s335 = sshll.u32 [#allocation10], 4
          %s336 = int_to_ptr.vmem [resolvable:$true] %s335
          %338 = dma.hbm_to_vmem [thread:$0]  %s4, 16, %s336, [#allocation9]
        $region28: #{_dfkm_forward_impl.1} parent=11 // pred_fallthru
          _
        // Predicated region
        $region29: #{_dfkm_forward_impl.1} parent=11 // pred_check
          %p339 = pneg %p161
        $region30: #{_dfkm_forward_impl.1} parent=11 // pred_check_branch
          %341 = sbr.rel (%p339) target = $region32
        $region31: #{_dfkm_forward_impl.1} parent=11 // pred_region
          %s343 = ssub.s32 256, 256
          %344 = vsyncadd [#allocation12], %s343
          %s345 = sshll.u32 [#allocation11], 4
          %s346 = int_to_ptr.vmem [resolvable:$true] %s345
          %351 = dma.hbm_to_vmem [thread:$0]  %s5, 256, %s346, [#allocation12], 64, 64, 4
        $region32: #{_dfkm_forward_impl.1} parent=11 // pred_fallthru
          _
        // Predicated region
        $region33: #{_dfkm_forward_impl.1} parent=11 // pred_check
          %p352 = pneg %p182
        $region34: #{_dfkm_forward_impl.1} parent=11 // pred_check_branch
          %354 = sbr.rel (%p352) target = $region36
        $region35: #{_dfkm_forward_impl.1} parent=11 // pred_region
          %s356 = ssub.s32 16, 16
          %357 = vsyncadd [#allocation12], %s356
          %s359 = sshll.u32 [#allocation13], 4
          %s360 = int_to_ptr.vmem [resolvable:$true] %s359
          %362 = dma.hbm_to_vmem [thread:$0]  %s6, 16, %s360, [#allocation12]
        $region36: #{_dfkm_forward_impl.1} parent=11 // pred_fallthru
          _
        // Predicated region
        $region37: #{_dfkm_forward_impl.1} parent=11 // pred_check
          %p363 = pneg %p203
        $region38: #{_dfkm_forward_impl.1} parent=11 // pred_check_branch
          %365 = sbr.rel (%p363) target = $region40
        $region39: #{_dfkm_forward_impl.1} parent=11 // pred_region
          %s367 = ssub.s32 1024, 1024
          %368 = vsyncadd [#allocation15], %s367
          %s369 = sshll.u32 [#allocation14], 4
          %s370 = int_to_ptr.vmem [resolvable:$true] %s369
          %375 = dma.hbm_to_vmem [thread:$0]  %s7, 1024, %s370, [#allocation15], 64, 64, 4
        $region40: #{_dfkm_forward_impl.1} parent=11 // pred_fallthru
          _
        // Predicated region
        $region41: #{_dfkm_forward_impl.1} parent=11 // pred_check
          %p376 = pneg %p224
        $region42: #{_dfkm_forward_impl.1} parent=11 // pred_check_branch
          %378 = sbr.rel (%p376) target = $region44
        $region43: #{_dfkm_forward_impl.1} parent=11 // pred_region
          %s380 = ssub.s32 16, 16
          %381 = vsyncadd [#allocation15], %s380
          %s383 = sshll.u32 [#allocation16], 4
          %s384 = int_to_ptr.vmem [resolvable:$true] %s383
          %386 = dma.hbm_to_vmem [thread:$0]  %s8, 16, %s384, [#allocation15]
        $region44: #{_dfkm_forward_impl.1} parent=11 // pred_fallthru
          _
      $region12: #{_dfkm_forward_impl.1} parent=5 // pred_fallthru
        _
      %p387 = scmp.lt.s32.totalorder %s30, 2
      // Predicated region
      $region45: #{_dfkm_forward_impl.1} parent=5 // pred_check
        %p388 = pneg %p387
      $region46: #{_dfkm_forward_impl.1} parent=5 // pred_check_branch
        %390 = sbr.rel (%p388) target = $region48
      $region47: #{_dfkm_forward_impl.1} parent=5 // pred_region
        // Predicated region
        $region49: #{_dfkm_forward_impl.1} parent=47 // pred_check
          %p391 = pneg %p50
        $region50: #{_dfkm_forward_impl.1} parent=47 // pred_check_branch
          %393 = sbr.rel (%p391) target = $region52
        $region51: #{_dfkm_forward_impl.1} parent=47 // pred_region
          %s394 = sand.u32 %s40, 1
          %s395 = scalar_lea.sflag [#allocation3], %s394
          %s396 = sand.u32 %s40, 1
          %s397 = smul.addr %s396, 16
          %s398 = scalar_lea.vmem [#allocation2], %s397
          %s399 = smul.u32 2, %s30
          %s400 = ssub.s32 3, %s399
          %p401 = scmp.lt.s32.totalorder %s400, 2
          %s402 = scalar_select %p401, %s400, 2
          %s403 = smul.u32 128, %s402
          %s405 = ssub.s32 256, %s403
          %406 = vsyncadd %s395, %s405
          %p407 = scmp.ne.s32.totalorder 0, %s403
          %s408 = smul.addr %s399, 128
          %s409 = scalar_lea.hbm %s0, %s408
          %s410 = smul.u32 8, %s402
          %s411 = sshll.u32 %s398, 4
          %s412 = int_to_ptr.vmem [resolvable:$true] %s411
          %s413 = sshll.u32 %s410, 4
          %417 = dma.hbm_to_vmem [thread:$0]  (%p407), %s409, %s413, %s412, %s395, 128, 128, 8
        $region52: #{_dfkm_forward_impl.1} parent=47 // pred_fallthru
          _
      $region48: #{_dfkm_forward_impl.1} parent=5 // pred_fallthru
        _
      %p418 = scmp.le.s32.totalorder 1, %s30
      %p419 = scmp.lt.s32.totalorder %s30, 3
      %p420 = pnand %p418, %p419
      %p421 = pneg %p420
      // Predicated region
      $region53: #{_dfkm_forward_impl.1} parent=5 // pred_check
        _
      $region54: #{_dfkm_forward_impl.1} parent=5 // pred_check_branch
        %423 = sbr.rel (%p420) target = $region56
      $region55: #{_dfkm_forward_impl.1} parent=5 // pred_region
        %s424 = ssub.s32 %s30, 1
        %s425 = sand.u32 %s43, 1
        %s426 = scalar_lea.sflag [#allocation3], %s425
        %s427 = sand.u32 %s43, 1
        %s428 = smul.addr %s427, 16
        %s429 = scalar_lea.vmem [#allocation2], %s428
        // Predicated region
        $region57: #{_dfkm_forward_impl.1} parent=55 // pred_check
          %p430 = pneg %p56
        $region58: #{_dfkm_forward_impl.1} parent=55 // pred_check_branch
          %432 = sbr.rel (%p430) target = $region60
        $region59: #{_dfkm_forward_impl.1} parent=55 // pred_region
          %433 = dma.done %s426, 256
        $region60: #{_dfkm_forward_impl.1} parent=55 // pred_fallthru
          _
        // Predicated region
        $region61: #{_dfkm_forward_impl.1} parent=55 // pred_check
          %p434 = pneg %p77
        $region62: #{_dfkm_forward_impl.1} parent=55 // pred_check_branch
          %436 = sbr.rel (%p434) target = $region64
        $region63: #{_dfkm_forward_impl.1} parent=55 // pred_region
          %437 = dma.done [#allocation6], 512
        $region64: #{_dfkm_forward_impl.1} parent=55 // pred_fallthru
          _
        // Predicated region
        $region65: #{_dfkm_forward_impl.1} parent=55 // pred_check
          %p438 = pneg %p98
        $region66: #{_dfkm_forward_impl.1} parent=55 // pred_check_branch
          %440 = sbr.rel (%p438) target = $region68
        $region67: #{_dfkm_forward_impl.1} parent=55 // pred_region
          %441 = dma.done [#allocation6], 16
        $region68: #{_dfkm_forward_impl.1} parent=55 // pred_fallthru
          _
        // Predicated region
        $region69: #{_dfkm_forward_impl.1} parent=55 // pred_check
          %p442 = pneg %p119
        $region70: #{_dfkm_forward_impl.1} parent=55 // pred_check_branch
          %444 = sbr.rel (%p442) target = $region72
        $region71: #{_dfkm_forward_impl.1} parent=55 // pred_region
          %445 = dma.done [#allocation9], 1024
        $region72: #{_dfkm_forward_impl.1} parent=55 // pred_fallthru
          _
        // Predicated region
        $region73: #{_dfkm_forward_impl.1} parent=55 // pred_check
          %p446 = pneg %p140
        $region74: #{_dfkm_forward_impl.1} parent=55 // pred_check_branch
          %448 = sbr.rel (%p446) target = $region76
        $region75: #{_dfkm_forward_impl.1} parent=55 // pred_region
          %449 = dma.done [#allocation9], 16
        $region76: #{_dfkm_forward_impl.1} parent=55 // pred_fallthru
          _
        // Predicated region
        $region77: #{_dfkm_forward_impl.1} parent=55 // pred_check
          %p450 = pneg %p161
        $region78: #{_dfkm_forward_impl.1} parent=55 // pred_check_branch
          %452 = sbr.rel (%p450) target = $region80
        $region79: #{_dfkm_forward_impl.1} parent=55 // pred_region
          %453 = dma.done [#allocation12], 256
        $region80: #{_dfkm_forward_impl.1} parent=55 // pred_fallthru
          _
        // Predicated region
        $region81: #{_dfkm_forward_impl.1} parent=55 // pred_check
          %p454 = pneg %p182
        $region82: #{_dfkm_forward_impl.1} parent=55 // pred_check_branch
          %456 = sbr.rel (%p454) target = $region84
        $region83: #{_dfkm_forward_impl.1} parent=55 // pred_region
          %457 = dma.done [#allocation12], 16
        $region84: #{_dfkm_forward_impl.1} parent=55 // pred_fallthru
          _
        // Predicated region
        $region85: #{_dfkm_forward_impl.1} parent=55 // pred_check
          %p458 = pneg %p203
        $region86: #{_dfkm_forward_impl.1} parent=55 // pred_check_branch
          %460 = sbr.rel (%p458) target = $region88
        $region87: #{_dfkm_forward_impl.1} parent=55 // pred_region
          %461 = dma.done [#allocation15], 1024
        $region88: #{_dfkm_forward_impl.1} parent=55 // pred_fallthru
          _
        // Predicated region
        $region89: #{_dfkm_forward_impl.1} parent=55 // pred_check
          %p462 = pneg %p224
        $region90: #{_dfkm_forward_impl.1} parent=55 // pred_check_branch
          %464 = sbr.rel (%p462) target = $region92
        $region91: #{_dfkm_forward_impl.1} parent=55 // pred_region
          %465 = dma.done [#allocation15], 16
        $region92: #{_dfkm_forward_impl.1} parent=55 // pred_fallthru
          _
        %s466 = sand.u32 %s43, 1
        %s467 = scalar_lea.sflag [#allocation3], %s466
        %s468 = sand.u32 %s43, 1
        %s469 = smul.addr %s468, 16
        %s470 = scalar_lea.vmem [#allocation2], %s469
        %p471 = pneg %p56
        %p472 = pneg %p53
        %p473 = pneg %p77
        %p474 = pneg %p74
        %p475 = pneg %p98
        %p476 = pneg %p95
        %p477 = pneg %p119
        %p478 = pneg %p116
        %p479 = pneg %p140
        %p480 = pneg %p137
        %p481 = pneg %p161
        %p482 = pneg %p158
        %p483 = pneg %p182
        %p484 = pneg %p179
        %p485 = pneg %p203
        %p486 = pneg %p200
        %p487 = pneg %p224
        %p488 = pneg %p221
        %p489 = pneg %p250
        %p490 = pneg %p247
        %s491 = sand.u32 %s237, 1
        %s492 = scalar_lea.sflag [#allocation4], %s491
        %s493 = sand.u32 %s237, 1
        %s494 = smul.addr %s493, 16
        %s495 = scalar_lea.vmem [#allocation17], %s494
        %p496 = pneg %p276
        %p497 = pneg %p273
        %s498 = sand.u32 %s263, 1
        %s499 = scalar_lea.sflag [#allocation19], %s498
        %s500 = sand.u32 %s263, 1
        %s501 = smul.addr %s500, 16
        %s502 = scalar_lea.vmem [#allocation18], %s501
        %s503 = smul.u32 2, %s35
        %s504 = ssub.s32 3, %s503
        %p505 = scmp.lt.s32.totalorder %s504, 2
        %s506 = scalar_select %p505, %s504, 2
        %s507 = smul.u32 128, %s506
        %s508 = smul.u32 2, %s35
        %s509 = ssub.s32 3, %s508
        %p510 = scmp.lt.s32.totalorder %s509, 2
        %s511 = scalar_select %p510, %s509, 2
        %s512 = smul.u32 128, %s511
        %s513 = smul.u32 2, %s35
        %s514 = ssub.s32 3, %s513
        %p515 = scmp.lt.s32.totalorder %s514, 2
        %s516 = scalar_select %p515, %s514, 2
        %s517 = smul.u32 128, %s516
        %v519 = vld [vmem:[%s429] sm:$0xff]
        %v520 = vld [vmem:[%s429 + $0x8] sm:$0xff]
        %v521 = vpack.c.bf16 %v520, %v519
        %v522 = vld [vmem:[#allocation5] sm:$0xf]
        %v523 = vld [vmem:[#allocation5 + $0x4] sm:$0xf]
        %v524 = vld [vmem:[#allocation5 + $0x8] sm:$0xf]
        %v525 = vld [vmem:[#allocation5 + $0xc] sm:$0xf]
        %v526 = vld [vmem:[#allocation5 + $0x10] sm:$0xf]
        %v527 = vld [vmem:[#allocation5 + $0x14] sm:$0xf]
        %v528 = vld [vmem:[#allocation5 + $0x18] sm:$0xf]
        %v529 = vld [vmem:[#allocation5 + $0x1c] sm:$0xf]
        %v530 = vld [vmem:[#allocation7] sm:$0x1]
        %v532 = vlaneseq
        %v533 = vshrl.u32 %v532, 7
        %v534 = vsub.s32 0, %v533
        %v535 = vrot.slane %v530, %v534
        %v545 = vunpack.c.l.b16 %v522
        %v546 = vunpack.c.l.b16 %v523
        %v547 = vunpack.c.l.b16 %v524
        %v548 = vunpack.c.l.b16 %v525
        %v549 = vunpack.c.l.b16 %v526
        %v550 = vunpack.c.l.b16 %v527
        %v551 = vunpack.c.l.b16 %v528
        %v552 = vunpack.c.l.b16 %v529
        %v553 = vpack.c.b16 %v546, %v545
        %v554 = vpack.c.b16 %v548, %v547
        %v555 = vpack.c.b16 %v550, %v549
        %v556 = vpack.c.b16 %v552, %v551
        %vm561 = vcmask 523264
        %v563 = vsel %vm561, %v521, 0
        %565 = vmatprep.subr.bf16.mxu0 0
        %566 = vmatpush1.bf16.msra.mxu0 %v553
        %567 = vmatprep.subr.bf16.mxu0 0
        %568 = vmatpush1.bf16.msra.mxu0 %v554
        %569 = vmatprep.subr.bf16.mxu0 0
        %570 = vmatpush1.bf16.msra.mxu0 %v555
        %571 = vmatprep.subr.bf16.mxu0 0
        %572 = vmatpush1.bf16.msra.mxu0 %v556
        %573 = vmatprep.subr.bf16.mxu0 0
        %574 = vmatpush1.bf16.msra.mxu0 0
        %575 = vmatprep.subr.bf16.mxu0 0
        %576 = vmatpush1.bf16.msra.mxu0 0
        %577 = vmatprep.subr.bf16.mxu0 0
        %578 = vmatpush1.bf16.msra.mxu0 0
        %579 = vmatprep.subr.bf16.mxu0 0
        %580 = vmatpush1.bf16.msra.mxu0 0
        %581 = vmatprep.subr.bf16.mxu0 0
        %582 = vmatpush1.bf16.msra.mxu0 0
        %583 = vmatprep.subr.bf16.mxu0 0
        %584 = vmatpush1.bf16.msra.mxu0 0
        %585 = vmatprep.subr.bf16.mxu0 0
        %586 = vmatpush1.bf16.msra.mxu0 0
        %587 = vmatprep.subr.bf16.mxu0 0
        %588 = vmatpush1.bf16.msra.mxu0 0
        %589 = vmatprep.subr.bf16.mxu0 0
        %590 = vmatpush1.bf16.msra.mxu0 0
        %591 = vmatprep.subr.bf16.mxu0 0
        %592 = vmatpush1.bf16.msra.mxu0 0
        %593 = vmatprep.subr.bf16.mxu0 0
        %594 = vmatpush1.bf16.msra.mxu0 0
        %595 = vmatprep.subr.bf16.mxu0 0
        %596 = vmatpush1.bf16.msra.mxu0 0
        %597 = vmatprep.mubr.bf16.mxu0 0
        %598 = vmatmul.mubr.bf16.gmra.mrb[0].mxu0 %v563
        %v599 = vpop.f32.mrb[0].mxu0
        %v600 = vadd.f32 %v535, %v599
        %v601 = vpop.f32.mrb[0].mxu0
        %v602 = vpop.f32.mrb[0].mxu0
        %v603 = vadd.f32 %v535, %v602
        %v604 = vpop.f32.mrb[0].mxu0
        %605 = vdwg.mxu0
        %v606 = vtanh.pop %v600
        %v607 = vtanh.pop %v603
        %v608 = vpack.c.bf16 %v607, %v606
        %v609 = vld [vmem:[#allocation8] sm:$0xf]
        %v610 = vld [vmem:[#allocation8 + $0x4] sm:$0xf]
        %v611 = vld [vmem:[#allocation8 + $0x8] sm:$0xf]
        %v612 = vld [vmem:[#allocation8 + $0xc] sm:$0xf]
        %v613 = vld [vmem:[#allocation8 + $0x10] sm:$0xf]
        %v614 = vld [vmem:[#allocation8 + $0x14] sm:$0xf]
        %v615 = vld [vmem:[#allocation8 + $0x18] sm:$0xf]
        %v616 = vld [vmem:[#allocation8 + $0x1c] sm:$0xf]
        %v617 = vld [vmem:[#allocation8 + $0x20] sm:$0xf]
        %v618 = vld [vmem:[#allocation8 + $0x24] sm:$0xf]
        %v619 = vld [vmem:[#allocation8 + $0x28] sm:$0xf]
        %v620 = vld [vmem:[#allocation8 + $0x2c] sm:$0xf]
        %v621 = vld [vmem:[#allocation8 + $0x30] sm:$0xf]
        %v622 = vld [vmem:[#allocation8 + $0x34] sm:$0xf]
        %v623 = vld [vmem:[#allocation8 + $0x38] sm:$0xf]
        %v624 = vld [vmem:[#allocation8 + $0x3c] sm:$0xf]
        %v625 = vld [vmem:[#allocation10] sm:$0x1]
        %v627 = vlaneseq
        %v628 = vshrl.u32 %v627, 7
        %v629 = vsub.s32 0, %v628
        %v630 = vrot.slane %v625, %v629
        %v648 = vunpack.c.l.b16 %v609
        %v649 = vunpack.c.l.b16 %v610
        %v650 = vunpack.c.l.b16 %v611
        %v651 = vunpack.c.l.b16 %v612
        %v652 = vunpack.c.l.b16 %v613
        %v653 = vunpack.c.l.b16 %v614
        %v654 = vunpack.c.l.b16 %v615
        %v655 = vunpack.c.l.b16 %v616
        %v656 = vunpack.c.l.b16 %v617
        %v657 = vunpack.c.l.b16 %v618
        %v658 = vunpack.c.l.b16 %v619
        %v659 = vunpack.c.l.b16 %v620
        %v660 = vunpack.c.l.b16 %v621
        %v661 = vunpack.c.l.b16 %v622
        %v662 = vunpack.c.l.b16 %v623
        %v663 = vunpack.c.l.b16 %v624
        %v664 = vpack.c.b16 %v649, %v648
        %v665 = vpack.c.b16 %v651, %v650
        %v666 = vpack.c.b16 %v653, %v652
        %v667 = vpack.c.b16 %v655, %v654
        %v668 = vpack.c.b16 %v657, %v656
        %v669 = vpack.c.b16 %v659, %v658
        %v670 = vpack.c.b16 %v661, %v660
        %v671 = vpack.c.b16 %v663, %v662
        %680 = vmatprep.subr.bf16.mxu0 0
        %681 = vmatpush1.bf16.msra.mxu0 %v664
        %682 = vmatprep.subr.bf16.mxu0 0
        %683 = vmatpush1.bf16.msra.mxu0 %v665
        %684 = vmatprep.subr.bf16.mxu0 0
        %685 = vmatpush1.bf16.msra.mxu0 %v666
        %686 = vmatprep.subr.bf16.mxu0 0
        %687 = vmatpush1.bf16.msra.mxu0 %v667
        %688 = vmatprep.subr.bf16.mxu0 0
        %689 = vmatpush1.bf16.msra.mxu0 %v668
        %690 = vmatprep.subr.bf16.mxu0 0
        %691 = vmatpush1.bf16.msra.mxu0 %v669
        %692 = vmatprep.subr.bf16.mxu0 0
        %693 = vmatpush1.bf16.msra.mxu0 %v670
        %694 = vmatprep.subr.bf16.mxu0 0
        %695 = vmatpush1.bf16.msra.mxu0 %v671
        %696 = vmatprep.subr.bf16.mxu0 0
        %697 = vmatpush1.bf16.msra.mxu0 0
        %698 = vmatprep.subr.bf16.mxu0 0
        %699 = vmatpush1.bf16.msra.mxu0 0
        %700 = vmatprep.subr.bf16.mxu0 0
        %701 = vmatpush1.bf16.msra.mxu0 0
        %702 = vmatprep.subr.bf16.mxu0 0
        %703 = vmatpush1.bf16.msra.mxu0 0
        %704 = vmatprep.subr.bf16.mxu0 0
        %705 = vmatpush1.bf16.msra.mxu0 0
        %706 = vmatprep.subr.bf16.mxu0 0
        %707 = vmatpush1.bf16.msra.mxu0 0
        %708 = vmatprep.subr.bf16.mxu0 0
        %709 = vmatpush1.bf16.msra.mxu0 0
        %710 = vmatprep.subr.bf16.mxu0 0
        %711 = vmatpush1.bf16.msra.mxu0 0
        %712 = vmatprep.mubr.bf16.mxu0 0
        %713 = vmatmul.mubr.bf16.gmra.mrb[0].mxu0 %v608
        %v714 = vpop.f32.mrb[0].mxu0
        %v715 = vadd.f32 %v630, %v714
        %v716 = vpop.f32.mrb[0].mxu0
        %v717 = vpop.f32.mrb[0].mxu0
        %v718 = vadd.f32 %v630, %v717
        %v719 = vpop.f32.mrb[0].mxu0
        %720 = vdwg.mxu0
        %v721 = vtanh.pop %v715
        %v722 = vtanh.pop %v718
        %v723 = vpack.c.bf16 %v722, %v721
        %v724 = vld [vmem:[#allocation11] sm:$0xf]
        %v725 = vld [vmem:[#allocation11 + $0x4] sm:$0xf]
        %v726 = vld [vmem:[#allocation11 + $0x8] sm:$0xf]
        %v727 = vld [vmem:[#allocation11 + $0xc] sm:$0xf]
        %v728 = vld [vmem:[#allocation13] sm:$0x1]
        %v730 = vlaneseq
        %v731 = vshrl.u32 %v730, 7
        %v732 = vsub.s32 0, %v731
        %v733 = vrot.slane %v728, %v732
        %v739 = vunpack.c.l.b16 %v724
        %v740 = vunpack.c.l.b16 %v725
        %v741 = vunpack.c.l.b16 %v726
        %v742 = vunpack.c.l.b16 %v727
        %v743 = vpack.c.b16 %v740, %v739
        %v744 = vpack.c.b16 %v742, %v741
        %vm747 = vcmask 261120
        %v749 = vsel %vm747, %v723, 0
        %751 = vmatprep.subr.bf16.mxu0 0
        %752 = vmatpush1.bf16.msra.mxu0 %v743
        %753 = vmatprep.subr.bf16.mxu0 0
        %754 = vmatpush1.bf16.msra.mxu0 %v744
        %755 = vmatprep.subr.bf16.mxu0 0
        %756 = vmatpush1.bf16.msra.mxu0 0
        %757 = vmatprep.subr.bf16.mxu0 0
        %758 = vmatpush1.bf16.msra.mxu0 0
        %759 = vmatprep.subr.bf16.mxu0 0
        %760 = vmatpush1.bf16.msra.mxu0 0
        %761 = vmatprep.subr.bf16.mxu0 0
        %762 = vmatpush1.bf16.msra.mxu0 0
        %763 = vmatprep.subr.bf16.mxu0 0
        %764 = vmatpush1.bf16.msra.mxu0 0
        %765 = vmatprep.subr.bf16.mxu0 0
        %766 = vmatpush1.bf16.msra.mxu0 0
        %767 = vmatprep.subr.bf16.mxu0 0
        %768 = vmatpush1.bf16.msra.mxu0 0
        %769 = vmatprep.subr.bf16.mxu0 0
        %770 = vmatpush1.bf16.msra.mxu0 0
        %771 = vmatprep.subr.bf16.mxu0 0
        %772 = vmatpush1.bf16.msra.mxu0 0
        %773 = vmatprep.subr.bf16.mxu0 0
        %774 = vmatpush1.bf16.msra.mxu0 0
        %775 = vmatprep.subr.bf16.mxu0 0
        %776 = vmatpush1.bf16.msra.mxu0 0
        %777 = vmatprep.subr.bf16.mxu0 0
        %778 = vmatpush1.bf16.msra.mxu0 0
        %779 = vmatprep.subr.bf16.mxu0 0
        %780 = vmatpush1.bf16.msra.mxu0 0
        %781 = vmatprep.subr.bf16.mxu0 0
        %782 = vmatpush1.bf16.msra.mxu0 0
        %783 = vmatprep.mubr.bf16.mxu0 0
        %784 = vmatmul.mubr.bf16.gmra.mrb[0].mxu0 %v749
        %v785 = vpop.f32.mrb[0].mxu0
        %v786 = vadd.f32 %v733, %v785
        %v787 = vpop.f32.mrb[0].mxu0
        %v788 = vpop.f32.mrb[0].mxu0
        %v789 = vadd.f32 %v733, %v788
        %v790 = vpop.f32.mrb[0].mxu0
        %791 = vdwg.mxu0
        %v792 = vtanh.pop %v786
        %v793 = vtanh.pop %v789
        %v794 = vpack.c.bf16 %v793, %v792
        %v795 = vld [vmem:[#allocation14] sm:$0xf]
        %v796 = vld [vmem:[#allocation14 + $0x4] sm:$0xf]
        %v797 = vld [vmem:[#allocation14 + $0x8] sm:$0xf]
        %v798 = vld [vmem:[#allocation14 + $0xc] sm:$0xf]
        %v799 = vld [vmem:[#allocation14 + $0x10] sm:$0xf]
        %v800 = vld [vmem:[#allocation14 + $0x14] sm:$0xf]
        %v801 = vld [vmem:[#allocation14 + $0x18] sm:$0xf]
        %v802 = vld [vmem:[#allocation14 + $0x1c] sm:$0xf]
        %v803 = vld [vmem:[#allocation14 + $0x20] sm:$0xf]
        %v804 = vld [vmem:[#allocation14 + $0x24] sm:$0xf]
        %v805 = vld [vmem:[#allocation14 + $0x28] sm:$0xf]
        %v806 = vld [vmem:[#allocation14 + $0x2c] sm:$0xf]
        %v807 = vld [vmem:[#allocation14 + $0x30] sm:$0xf]
        %v808 = vld [vmem:[#allocation14 + $0x34] sm:$0xf]
        %v809 = vld [vmem:[#allocation14 + $0x38] sm:$0xf]
        %v810 = vld [vmem:[#allocation14 + $0x3c] sm:$0xf]
        %v811 = vld [vmem:[#allocation16] sm:$0x1]
        %v813 = vlaneseq
        %v814 = vshrl.u32 %v813, 7
        %v815 = vsub.s32 0, %v814
        %v816 = vrot.slane %v811, %v815
        %v834 = vunpack.c.l.b16 %v795
        %v835 = vunpack.c.l.b16 %v796
        %v836 = vunpack.c.l.b16 %v797
        %v837 = vunpack.c.l.b16 %v798
        %v838 = vunpack.c.l.b16 %v799
        %v839 = vunpack.c.l.b16 %v800
        %v840 = vunpack.c.l.b16 %v801
        %v841 = vunpack.c.l.b16 %v802
        %v842 = vunpack.c.l.b16 %v803
        %v843 = vunpack.c.l.b16 %v804
        %v844 = vunpack.c.l.b16 %v805
        %v845 = vunpack.c.l.b16 %v806
        %v846 = vunpack.c.l.b16 %v807
        %v847 = vunpack.c.l.b16 %v808
        %v848 = vunpack.c.l.b16 %v809
        %v849 = vunpack.c.l.b16 %v810
        %v850 = vpack.c.b16 %v835, %v834
        %v851 = vpack.c.b16 %v837, %v836
        %v852 = vpack.c.b16 %v839, %v838
        %v853 = vpack.c.b16 %v841, %v840
        %v854 = vpack.c.b16 %v843, %v842
        %v855 = vpack.c.b16 %v845, %v844
        %v856 = vpack.c.b16 %v847, %v846
        %v857 = vpack.c.b16 %v849, %v848
        %866 = vmatprep.subr.bf16.mxu0 0
        %867 = vmatpush1.bf16.msra.mxu0 %v850
        %868 = vmatprep.subr.bf16.mxu0 0
        %869 = vmatpush1.bf16.msra.mxu0 %v851
        %870 = vmatprep.subr.bf16.mxu0 0
        %871 = vmatpush1.bf16.msra.mxu0 %v852
        %872 = vmatprep.subr.bf16.mxu0 0
        %873 = vmatpush1.bf16.msra.mxu0 %v853
        %874 = vmatprep.subr.bf16.mxu0 0
        %875 = vmatpush1.bf16.msra.mxu0 %v854
        %876 = vmatprep.subr.bf16.mxu0 0
        %877 = vmatpush1.bf16.msra.mxu0 %v855
        %878 = vmatprep.subr.bf16.mxu0 0
        %879 = vmatpush1.bf16.msra.mxu0 %v856
        %880 = vmatprep.subr.bf16.mxu0 0
        %881 = vmatpush1.bf16.msra.mxu0 %v857
        %882 = vmatprep.subr.bf16.mxu0 0
        %883 = vmatpush1.bf16.msra.mxu0 0
        %884 = vmatprep.subr.bf16.mxu0 0
        %885 = vmatpush1.bf16.msra.mxu0 0
        %886 = vmatprep.subr.bf16.mxu0 0
        %887 = vmatpush1.bf16.msra.mxu0 0
        %888 = vmatprep.subr.bf16.mxu0 0
        %889 = vmatpush1.bf16.msra.mxu0 0
        %890 = vmatprep.subr.bf16.mxu0 0
        %891 = vmatpush1.bf16.msra.mxu0 0
        %892 = vmatprep.subr.bf16.mxu0 0
        %893 = vmatpush1.bf16.msra.mxu0 0
        %894 = vmatprep.subr.bf16.mxu0 0
        %895 = vmatpush1.bf16.msra.mxu0 0
        %896 = vmatprep.subr.bf16.mxu0 0
        %897 = vmatpush1.bf16.msra.mxu0 0
        %898 = vmatprep.mubr.bf16.mxu0 0
        %899 = vmatmul.mubr.bf16.gmra.mrb[0].mxu0 %v794
        %v900 = vpop.f32.mrb[0].mxu0
        %v901 = vadd.f32 %v816, %v900
        %v902 = vpop.f32.mrb[0].mxu0
        %v903 = vpop.f32.mrb[0].mxu0
        %v904 = vadd.f32 %v816, %v903
        %v905 = vpop.f32.mrb[0].mxu0
        %906 = vdwg.mxu0
        %v907 = vtanh.pop %v901
        %v908 = vtanh.pop %v904
        %909 = vst.msk [vmem:[%s495] sm:$0xff] %vm747, %v721
        %910 = vst.msk [vmem:[%s495 + $0x8] sm:$0xff] %vm747, %v722
        %911 = vst.msk [vmem:[%s502] sm:$0xff] %vm561, %v907
        %912 = vst.msk [vmem:[%s502 + $0x8] sm:$0xff] %vm561, %v908
        %s913 = sand.u32 %s237, 1
        %s914 = scalar_lea.sflag [#allocation4], %s913
        %s915 = sand.u32 %s237, 1
        %s916 = smul.addr %s915, 16
        %s917 = scalar_lea.vmem [#allocation17], %s916
        %s918 = sand.u32 %s263, 1
        %s919 = scalar_lea.sflag [#allocation19], %s918
        %s920 = sand.u32 %s263, 1
        %s921 = smul.addr %s920, 16
        %s922 = scalar_lea.vmem [#allocation18], %s921
        // Predicated region
        $region93: #{_dfkm_forward_impl.1} parent=55 // pred_check
          %p923 = pneg %p247
        $region94: #{_dfkm_forward_impl.1} parent=55 // pred_check_branch
          %925 = sbr.rel (%p923) target = $region96
        $region95: #{_dfkm_forward_impl.1} parent=55 // pred_region
          %s926 = smul.u32 2, %s35
          %s927 = ssub.s32 3, %s926
          %p928 = scmp.lt.s32.totalorder %s927, 2
          %s929 = scalar_select %p928, %s927, 2
          %s930 = smul.u32 128, %s929
          %s932 = ssub.s32 256, %s930
          %933 = vsyncadd %s914, %s932
          %p934 = scmp.ne.s32.totalorder 0, %s930
          %s935 = smul.addr %s926, 128
          %s936 = scalar_lea.hbm %s9, %s935
          %s937 = smul.u32 8, %s929
          %s938 = sshll.u32 %s917, 4
          %s939 = int_to_ptr.vmem [resolvable:$true] %s938
          %s940 = sshll.u32 %s937, 4
          %944 = dma.vmem_to_hbm [thread:$0]  (%p934), %s939, %s940, %s936, %s914, 128, 128, 8
        $region96: #{_dfkm_forward_impl.1} parent=55 // pred_fallthru
          _
        // Predicated region
        $region97: #{_dfkm_forward_impl.1} parent=55 // pred_check
          %p945 = pneg %p273
        $region98: #{_dfkm_forward_impl.1} parent=55 // pred_check_branch
          %947 = sbr.rel (%p945) target = $region100
        $region99: #{_dfkm_forward_impl.1} parent=55 // pred_region
          %s948 = smul.u32 2, %s35
          %s949 = ssub.s32 3, %s948
          %p950 = scmp.lt.s32.totalorder %s949, 2
          %s951 = scalar_select %p950, %s949, 2
          %s952 = smul.u32 128, %s951
          %s954 = ssub.s32 256, %s952
          %955 = vsyncadd %s919, %s954
          %p956 = scmp.ne.s32.totalorder 0, %s952
          %s957 = smul.addr %s948, 128
          %s958 = scalar_lea.hbm %s10, %s957
          %s959 = smul.u32 8, %s951
          %s960 = sshll.u32 %s922, 4
          %s961 = int_to_ptr.vmem [resolvable:$true] %s960
          %s962 = sshll.u32 %s959, 4
          %966 = dma.vmem_to_hbm [thread:$0]  (%p956), %s961, %s962, %s958, %s919, 128, 128, 8
        $region100: #{_dfkm_forward_impl.1} parent=55 // pred_fallthru
          _
      $region56: #{_dfkm_forward_impl.1} parent=5 // pred_fallthru
        _
      %p967 = scmp.le.s32.totalorder 2, %s30
      // Predicated region
      $region101: #{_dfkm_forward_impl.1} parent=5 // pred_check
        %p968 = pneg %p967
      $region102: #{_dfkm_forward_impl.1} parent=5 // pred_check_branch
        %970 = sbr.rel (%p968) target = $region104
      $region103: #{_dfkm_forward_impl.1} parent=5 // pred_region
        %s971 = ssub.s32 %s30, 2
        // Predicated region
        $region105: #{_dfkm_forward_impl.1} parent=103 // pred_check
          %p972 = pneg %p253
        $region106: #{_dfkm_forward_impl.1} parent=103 // pred_check_branch
          %974 = sbr.rel (%p972) target = $region108
        $region107: #{_dfkm_forward_impl.1} parent=103 // pred_region
          %s975 = sand.u32 %s238, 1
          %s976 = scalar_lea.sflag [#allocation4], %s975
          %s977 = sand.u32 %s238, 1
          %s978 = smul.addr %s977, 16
          %s979 = scalar_lea.vmem [#allocation17], %s978
          %980 = dma.done %s976, 256
        $region108: #{_dfkm_forward_impl.1} parent=103 // pred_fallthru
          _
        // Predicated region
        $region109: #{_dfkm_forward_impl.1} parent=103 // pred_check
          %p981 = pneg %p279
        $region110: #{_dfkm_forward_impl.1} parent=103 // pred_check_branch
          %983 = sbr.rel (%p981) target = $region112
        $region111: #{_dfkm_forward_impl.1} parent=103 // pred_region
          %s984 = sand.u32 %s264, 1
          %s985 = scalar_lea.sflag [#allocation19], %s984
          %s986 = sand.u32 %s264, 1
          %s987 = smul.addr %s986, 16
          %s988 = scalar_lea.vmem [#allocation18], %s987
          %989 = dma.done %s985, 256
        $region112: #{_dfkm_forward_impl.1} parent=103 // pred_fallthru
          _
      $region104: #{_dfkm_forward_impl.1} parent=5 // pred_fallthru
        _
    $region6: #{_dfkm_forward_impl.1} parent=1 // loop_footer
      %s34 = sadd.s32 1, %s30
    $region7: #{_dfkm_forward_impl.1} parent=1 // loop_footer_branch
      %29 = sbr.rel target = $region3
    $region8: #{_dfkm_forward_impl.1} parent=1 // loop_exit
      _
    %990 = vsyncpa [#allocation3], 1
    %s991 = scalar_lea.sflag [#allocation3], 1
    %992 = vsyncpa %s991, 1
    %993 = vsyncpa [#allocation6], 1
    %994 = vsyncpa [#allocation9], 1
    %995 = vsyncpa [#allocation12], 1
    %996 = vsyncpa [#allocation15], 1
    %997 = vsyncpa [#allocation4], 1
    %s998 = scalar_lea.sflag [#allocation4], 1
    %999 = vsyncpa %s998, 1
    %1000 = vsyncpa [#allocation19], 1
    %s1001 = scalar_lea.sflag [#allocation19], 1
    %1002 = vsyncpa %s1001, 1

</llo_original>
